<compile_context>
chip_gen: v7x
topology: tpu7x:2x2x1
jax: 0.10.0
libtpu: 0.0.40
codegen_flags: <defaults>
</compile_context>

<pallas_src>
import jax
import jax.numpy as jnp
from jax.experimental import pallas as pl
from jax.experimental.pallas import tpu as pltpu

_LANES = 128
_MAX_BLOCK_ROWS = 2048                      # 2048 x 128 f32 = 1 MiB per block
_VMEM_LIMIT_BYTES = 32 * 1024 * 1024        # explicit: portable to v7x (32 MiB scoped default)


def _linear_kernel(x_ref, w_ref, b_ref, o_ref):
    # x_ref / o_ref: (block_rows, 128) lane-dense VMEM tiles.
    # w_ref / b_ref: (1, 1) f32 SMEM scalars (the 1x1 linear layer's weight & bias).
    w = w_ref[0, 0]
    b = b_ref[0, 0]
    # Single VPU fused multiply-add; no MXU push/drain, full unmasked 128-lane stores.
    o_ref[...] = (x_ref[...] * w + b).astype(o_ref.dtype)


def _pick_block_rows(rows: int) -> int:
    if rows <= 8:
        # A single block equal to the full (tiny) row extent is allowed by the
        # (8, 128) rule (block dim == full array dim).
        return rows
    # Aim for >= 2 grid steps so v7x's 2 TensorCores both get work via the
    # "parallel" axis, while keeping a multiple-of-8 sublane block and capping
    # at 1 MiB/block to amortize per-step pipeline overhead.
    target = pl.cdiv(rows, 2)
    return min(_MAX_BLOCK_ROWS, ((target + 7) // 8) * 8)


def linear_forward(x, weight, bias):
    """x: (N, 1), weight: (1, 1), bias: (1,). Returns (N, 1) = x @ W^T + b."""
    n, in_f = x.shape
    out_f = weight.shape[0]
    assert in_f == 1 and out_f == 1, "LinearRegressionModel is a 1 -> 1 linear layer"

    dtype = x.dtype
    # Keep params as f32 SMEM scalars regardless of x dtype (SMEM is 32-bit scalar space).
    w2d = weight.reshape(1, 1).astype(jnp.float32)
    b2d = bias.reshape(1, 1).astype(jnp.float32)

    rows = pl.cdiv(n, _LANES)
    n_lane_padded = rows * _LANES
    pad = n_lane_padded - n

    x_flat = x.reshape(-1)
    if pad:
        # Ragged-N fallback: pad only up to the next lane multiple (< 128 elems).
        # TODO(synk): for large ragged N this pad (+ final slice) costs extra HBM passes;
        # supply N % 128 == 0 (or fuse the fma into the producer) to hit the pad-free path.
        x_flat = jnp.pad(x_flat, (0, pad))
    x_lanes = x_flat.reshape(rows, _LANES)

    block_rows = _pick_block_rows(rows)
    grid = (pl.cdiv(rows, block_rows),)   # partial final row-block handled by Pallas masking

    y_lanes = pl.pallas_call(
        _linear_kernel,
        out_shape=jax.ShapeDtypeStruct((rows, _LANES), dtype),
        grid=grid,
        in_specs=[
            pl.BlockSpec((block_rows, _LANES), lambda i: (i, 0)),      # x tile (VMEM)
            pl.BlockSpec(memory_space=pltpu.MemorySpace.SMEM),         # weight scalar
            pl.BlockSpec(memory_space=pltpu.MemorySpace.SMEM),         # bias scalar
        ],
        out_specs=pl.BlockSpec((block_rows, _LANES), lambda i: (i, 0)),
        compiler_params=pltpu.CompilerParams(
            dimension_semantics=("parallel",),        # shards grid across TCs on v7x
            vmem_limit_bytes=_VMEM_LIMIT_BYTES,
        ),
    )(x_lanes, w2d, b2d)

    if pad:
        return y_lanes.reshape(-1)[:n].reshape(n, out_f)
    # Pad-free fast path: no post-call slice, just a layout-free reshape back to (N, 1).
    return y_lanes.reshape(n, out_f)


if __name__ == "__main__":
    # Build X exactly like the module's script: torch.arange(0, 1, 0.01).unsqueeze(1) -> (100, 1)
    X = (jnp.arange(100, dtype=jnp.float32) * 0.01).reshape(-1, 1)

    # Deterministic parameter init mirroring nn.Linear(1, 1) default:
    # uniform(-1/sqrt(in_features), 1/sqrt(in_features)) with PRNGKey(0).
    key = jax.random.PRNGKey(0)
    k_w, k_b = jax.random.split(key)
    bound = 1.0  # 1/sqrt(in_features=1)
    weight = jax.random.uniform(k_w, (1, 1), jnp.float32, -bound, bound)  # (out, in)
    bias = jax.random.uniform(k_b, (1,), jnp.float32, -bound, bound)      # (out,)

    # Ragged-N case (the module's actual input shape).
    y = jax.block_until_ready(linear_forward(X, weight, bias))
    y_ref = X @ weight.T + bias
    assert y.shape == (100, 1)
    assert jnp.allclose(y, y_ref, atol=1e-6, rtol=1e-6)

    # Also exercise the pad-free lane-dense path with a multi-step grid (N % 128 == 0).
    X2 = jax.random.normal(jax.random.PRNGKey(1), (2048, 1), jnp.float32)
    y2 = jax.block_until_ready(linear_forward(X2, weight, bias))
    y2_ref = X2 @ weight.T + bias
    assert y2.shape == (2048, 1)
    assert jnp.allclose(y2, y2_ref, atol=1e-6, rtol=1e-6)

    print("KERNEL_OK")
</pallas_src>

<mosaic_0001>
module attributes {stable_mosaic.version = 11 : i64} {
  func.func @_linear_kernel(%arg0: i32, %arg1: memref<1x128xf32, #tpu.memory_space<vmem>>, %arg2: memref<1x1xf32, #tpu.memory_space<smem>>, %arg3: memref<1x1xf32, #tpu.memory_space<smem>>, %arg4: memref<1x128xf32, #tpu.memory_space<vmem>>) attributes {dimension_semantics = [#tpu.dimension_semantics<parallel>], iteration_bounds = array<i64: 1>, scalar_prefetch = 0 : i64, scratch_operands = 0 : i64, tpu.core_type = #tpu.core_type<tc>, window_params = [{transform_indices = @transform_0, window_bounds = array<i64: 1, 128>}, {transform_indices = @transform_1, window_bounds = array<i64: 1, 1>}, {transform_indices = @transform_2, window_bounds = array<i64: 1, 1>}, {transform_indices = @transform_3, window_bounds = array<i64: 1, 128>}]} {
    %c0 = arith.constant 0 : index
    %c0_0 = arith.constant 0 : index
    %0 = memref.load %arg2[%c0, %c0_0] : memref<1x1xf32, #tpu.memory_space<smem>>
    %c0_1 = arith.constant 0 : index
    %c0_2 = arith.constant 0 : index
    %1 = memref.load %arg3[%c0_1, %c0_2] : memref<1x1xf32, #tpu.memory_space<smem>>
    %c0_3 = arith.constant 0 : index
    %c0_4 = arith.constant 0 : index
    %2 = vector.load %arg1[%c0_3, %c0_4] : memref<1x128xf32, #tpu.memory_space<vmem>>, vector<1x128xf32>
    %3 = vector.broadcast %0 : f32 to vector<1x128xf32>
    %4 = arith.mulf %2, %3 : vector<1x128xf32>
    %5 = vector.broadcast %1 : f32 to vector<1x128xf32>
    %6 = arith.addf %4, %5 : vector<1x128xf32>
    %c0_5 = arith.constant 0 : index
    %c0_6 = arith.constant 0 : index
    %7 = vector.load %arg4[%c0_5, %c0_6] : memref<1x128xf32, #tpu.memory_space<vmem>>, vector<1x128xf32>
    tpu.vector_store %arg4[%c0_5, %c0_6], %6 {strides = array<i32>} : memref<1x128xf32, #tpu.memory_space<vmem>>, vector<1x128xf32>,
    return
  }
  func.func @transform_0(%arg0: i32) -> (i32, i32) {
    %c0_i32 = arith.constant 0 : i32
    %c0_i32_0 = arith.constant 0 : i32
    return %arg0, %c0_i32 : i32, i32
  }
  func.func @transform_1(%arg0: i32) -> (i32, i32) {
    %c0_i32 = arith.constant 0 : i32
    %c0_i32_0 = arith.constant 0 : i32
    %c0_i32_1 = arith.constant 0 : i32
    return %c0_i32, %c0_i32_0 : i32, i32
  }
  func.func @transform_2(%arg0: i32) -> (i32, i32) {
    %c0_i32 = arith.constant 0 : i32
    %c0_i32_0 = arith.constant 0 : i32
    %c0_i32_1 = arith.constant 0 : i32
    return %c0_i32, %c0_i32_0 : i32, i32
  }
  func.func @transform_3(%arg0: i32) -> (i32, i32) {
    %c0_i32 = arith.constant 0 : i32
    %c0_i32_0 = arith.constant 0 : i32
    return %arg0, %c0_i32 : i32, i32
  }
}

</mosaic_0001>

<llo_original>
// kernel: tpu_custom_call.1
$region0: #{tpu_custom_call.1}
  #allocation0 [shape = 'u32[]', space=smem, size = 0x4, offset = 0x4, fixed_abs, tag = 'smem constant byte address 0x4 - core index']
  #allocation1 [shape = 'u32[144,128]{1,0:T(1,128)}', space=vmem, size = 0x12000, scoped, tag = 'internal scratch']
  #allocation2 [shape = 'f32[1,1]{1,0:T(1,128)S(6)}', space=smem, size = 0x200, scoped, tag = 'scoped memory for tpu_custom_call.1']
  #allocation3 [shape = 'f32[1,1]{1,0:T(1,128)S(6)}', space=smem, size = 0x200, scoped, tag = 'scoped memory for tpu_custom_call.1']
  %s0 = inlined_call_operand.vmem [shape: f32[1,128], index: 0, kind: input, shape index: {}]
  %s1 = inlined_call_operand.<no memory space> [shape: f32[1,1], index: 1, kind: input, shape index: {}]
  %s2 = inlined_call_operand.<no memory space> [shape: f32[1,1], index: 2, kind: input, shape index: {}]
  %s3 = inlined_call_operand.hbm [shape: f32[1,128], index: 3, kind: output, shape index: {}]
  %s4 = sld [smem:[#allocation0]]
  $region22: #{tpu_custom_call.1} parent=0
    _
  %s6 = ssub.s32 1, %s4
  %s7 = scalar_select 0, %s6, %s4
  %8 = sst [smem:[#allocation2]] %s1
  %9 = sst [smem:[#allocation3]] %s2
  $region1: #{tpu_custom_call.1} parent=0
    #allocation4 [shape = 'u8[512]{0}', space=vmem, size = 0x400, scoped, tag = 'output window, operand 0, single buffered']
    #allocation5 [shape = 's32[1]{0}', space=sflag, size = 0x4, scoped, tag = 'scoped memory for tpu_custom_call.1']
    %10 = vsyncpa [#allocation5], 0
    // Predicated region
    $region2: #{tpu_custom_call.1} parent=1 // pred_check
      _
    $region3: #{tpu_custom_call.1} parent=1 // pred_check_branch
      %12 = sbr.rel (0) target = $region5
    $region4: #{tpu_custom_call.1} parent=1 // pred_region
      _
    $region5: #{tpu_custom_call.1} parent=1 // pred_fallthru
      _
    // Predicated region
    $region6: #{tpu_custom_call.1} parent=1 // pred_check
      _
    $region7: #{tpu_custom_call.1} parent=1 // pred_check_branch
      %14 = sbr.rel (0) target = $region9
    $region8: #{tpu_custom_call.1} parent=1 // pred_region
      _
    $region9: #{tpu_custom_call.1} parent=1 // pred_fallthru
      _
    // Predicated region
    $region10: #{tpu_custom_call.1} parent=1 // pred_check
      _
    $region11: #{tpu_custom_call.1} parent=1 // pred_check_branch
      %16 = sbr.rel (0) target = $region13
    $region12: #{tpu_custom_call.1} parent=1 // pred_region
      _
    $region13: #{tpu_custom_call.1} parent=1 // pred_fallthru
      _
    %s17 = sld [smem:[#allocation2]]
    %s18 = sld [smem:[#allocation3]]
    %v19 = vld [vmem:[%s0] sm:$0x1]
    %v20 = vstv %s17
    %v21 = vmul.f32 %v19, %v20
    %v22 = vstv %s18
    %v23 = vadd.f32 %v21, %v22
    %24 = vst [vmem:[#allocation4] sm:$0x1] %v23
    // Predicated region
    $region14: #{tpu_custom_call.1} parent=1 // pred_check
      _
    $region15: #{tpu_custom_call.1} parent=1 // pred_check_branch
      %26 = sbr.rel (0) target = $region17
    $region16: #{tpu_custom_call.1} parent=1 // pred_region
      %s28 = ssub.s32 16, 16
      %29 = vsyncadd [#allocation5], %s28
      %s31 = sshll.u32 [#allocation4], 4
      %s32 = int_to_ptr.vmem [resolvable:$true] %s31
      %34 = dma.vmem_to_hbm [thread:$0]  %s32, 16, %s3, [#allocation5]
    $region17: #{tpu_custom_call.1} parent=1 // pred_fallthru
      _
    // Predicated region
    $region18: #{tpu_custom_call.1} parent=1 // pred_check
      _
    $region19: #{tpu_custom_call.1} parent=1 // pred_check_branch
      %36 = sbr.rel (0) target = $region21
    $region20: #{tpu_custom_call.1} parent=1 // pred_region
      %37 = dma.done [#allocation5], 16
    $region21: #{tpu_custom_call.1} parent=1 // pred_fallthru
      _
    %38 = vsyncpa [#allocation5], 1

</llo_original>
